<compile_context>
chip_gen: v7x
topology: tpu7x:2x2x1
jax: 0.10.0
libtpu: 0.0.40
codegen_flags: <defaults>
</compile_context>

<pallas_src>
from functools import partial

import jax
import jax.numpy as jnp
from jax import lax
from jax.experimental import pallas as pl
from jax.experimental.pallas import tpu as pltpu

_NEG_INF = -1e30   # finite mask value (safe under KV tiling, never NaN)


def _tpu_kind():
    try:
        return jax.devices()[0].device_kind.lower()
    except Exception:
        return ""


def _gen_defaults():
    """Generation-dependent knobs: (vmem_limit_bytes, attention tq target,
    softmax-exp dtype)."""
    kind = _tpu_kind()
    is_v7 = "v7" in kind
    is_v6 = "v6" in kind
    vmem = (40 if is_v7 else 64) * 1024 * 1024       # v7x: 64 MiB/TC physical
    tq_target = 512 if is_v6 else 256                # v6e: halve K/V refetch
    exp_dtype = jnp.bfloat16 if (is_v6 or is_v7) else jnp.float32  # v5e EUP: f32
    return vmem, tq_target, exp_dtype


def _pick_tile(n, target, align):
    """Largest tile t <= target with n % t == 0 and t % align == 0; falls back
    to the full dimension (always a legal block extent).
    NOTE: for long axes with no aligned divisor this falls back to the full
    axis; callers shrink the target against the VMEM budget first."""
    if n <= target:
        return n
    t = (target // align) * align
    while t >= align:
        if n % t == 0:
            return t
        t -= align
    return n


# --------------------------- tiled projection matmul ------------------------ #

def _matmul_kernel(x_ref, w_ref, o_ref, acc_ref, *, compute_dtype):
    @pl.when(pl.program_id(2) == 0)
    def _init():
        acc_ref[...] = jnp.zeros(acc_ref.shape, acc_ref.dtype)

    acc_ref[...] += jnp.dot(x_ref[...].astype(compute_dtype),
                            w_ref[...].astype(compute_dtype),
                            preferred_element_type=jnp.float32)

    @pl.when(pl.program_id(2) == pl.num_programs(2) - 1)
    def _done():
        o_ref[...] = acc_ref[...].astype(o_ref.dtype)


def pallas_matmul(x, w, *, out_dtype=jnp.float32, compute_dtype=jnp.bfloat16,
                  tm=512, tn=512, tk=512, vmem_limit=None):
    """x: (M, K) @ w: (K, N) -> (M, N) out_dtype, f32 accumulator."""
    M, K = x.shape
    K2, N = w.shape
    assert K == K2
    if vmem_limit is None:
        vmem_limit = _gen_defaults()[0]

    tm = _pick_tile(M, tm, 8)
    tn = _pick_tile(N, tn, 128)

    x_it = x.dtype.itemsize
    w_it = w.dtype.itemsize
    o_it = jnp.dtype(out_dtype).itemsize

    def _vmem_need(tk_):
        return (2 * tm * tk_ * x_it + 2 * tk_ * tn * w_it   # dbl-buffered x, w
                + 2 * tm * tn * o_it + tm * tn * 4)         # out + f32 acc

    # Full-K resident blocks when they fit: the K grid axis collapses to one
    # step, so x is fetched once per row band instead of being re-fetched for
    # every (N / tn) column band (perf review).
    if _vmem_need(K) <= (vmem_limit * 3) // 4:
        tk = K
    else:
        tk = _pick_tile(K, tk, 128)

    cost = pl.CostEstimate(
        flops=2 * M * N * K,
        transcendentals=0,
        bytes_accessed=(M * K * x_it + K * N * w_it + M * N * o_it))

    return pl.pallas_call(
        partial(_matmul_kernel, compute_dtype=compute_dtype),
        out_shape=jax.ShapeDtypeStruct((M, N), out_dtype),
        grid=(M // tm, N // tn, K // tk),
        in_specs=[pl.BlockSpec((tm, tk), lambda i, j, k: (i, k)),
                  pl.BlockSpec((tk, tn), lambda i, j, k: (k, j))],
        out_specs=pl.BlockSpec((tm, tn), lambda i, j, k: (i, j)),
        scratch_shapes=[pltpu.VMEM((tm, tn), jnp.float32)],
        compiler_params=pltpu.CompilerParams(
            dimension_semantics=("parallel", "parallel", "arbitrary"),
            vmem_limit_bytes=vmem_limit),
        cost_estimate=cost,
    )(x, w)


# ------------------------- flash multi-head attention ----------------------- #

def _mha_kernel(q_ref, k_ref, v_ref, o_ref, m_sc, l_sc, acc_sc, *,
                n_head, head_dim, tq, tkv, is_causal, compute_dtype, exp_dtype,
                approx_recip):
    """One (batch, q-tile, kv-tile) grid step; all heads handled per step.

    q_ref: (tq,  dim)  head-minor, softmax scale pre-folded into W_q
    k_ref, v_ref: (tkv, dim)
    o_ref: (n_head, tq, head_dim)      torch (b, h, n, d) layout
    m_sc, l_sc: (n_head, tq, 1) f32    running max / denominator (contiguous
                                        per-head slabs)
    acc_sc: (n_head, tq, head_dim) f32 running numerator
    """
    qi = pl.program_id(1)
    ki = pl.program_id(2)

    @pl.when(ki == 0)
    def _init():
        m_sc[...] = jnp.full(m_sc.shape, _NEG_INF, m_sc.dtype)
        l_sc[...] = jnp.zeros(l_sc.shape, l_sc.dtype)
        acc_sc[...] = jnp.zeros(acc_sc.shape, acc_sc.dtype)

    def _tile():
        if is_causal:                              # one mask, shared by all heads
            row = qi * tq + lax.broadcasted_iota(jnp.int32, (tq, tkv), 0)
            col = ki * tkv + lax.broadcasted_iota(jnp.int32, (tq, tkv), 1)
            keep = col <= row

        # Static unroll over heads.  Each head touches only its own
        # (tq/tkv, head_dim) Ref slice, so live vregs stay bounded instead of
        # keeping three full multi-head tiles resident (perf review).
        # TODO(synk): when head_dim < 128, process heads in 128-lane-aligned
        # pairs (or give heads a grid axis) to avoid unaligned lane slices.
        for h in range(n_head):
            lo = h * head_dim
            q_h = q_ref[:, lo:lo + head_dim].astype(compute_dtype)
            k_h = k_ref[:, lo:lo + head_dim].astype(compute_dtype)

            # scores: contract the last dims directly (no k.T / XLU transpose)
            s = lax.dot_general(q_h, k_h, (((1,), (1,)), ((), ())),
                                preferred_element_type=jnp.float32)  # (tq,tkv)
            if is_causal:
                s = jnp.where(keep, s, _NEG_INF)

            m_prev = m_sc[h]                                        # (tq, 1)
            m_new = jnp.maximum(m_prev, jnp.max(s, axis=-1, keepdims=True))
            alpha = jnp.exp(m_prev - m_new)                         # f32 rescale
            # exp of the probabilities in exp_dtype (bf16 EUP on v6e/v7x,
            # f32 on v5e); m / l / alpha stay f32.
            p = jnp.exp((s - m_new).astype(exp_dtype))
            l_sc[h] = alpha * l_sc[h] + jnp.sum(
                p.astype(jnp.float32), axis=-1, keepdims=True)
            v_h = v_ref[:, lo:lo + head_dim].astype(compute_dtype)
            acc_sc[h] = alpha * acc_sc[h] + jnp.dot(
                p.astype(compute_dtype), v_h,                       # bf16 MXU
                preferred_element_type=jnp.float32)
            m_sc[h] = m_new

    if is_causal:
        # Skip KV tiles that lie entirely above the diagonal.
        pl.when(ki * tkv <= qi * tq + (tq - 1))(_tile)
    else:
        _tile()

    @pl.when(ki == pl.num_programs(2) - 1)
    def _finalize():
        for h in range(n_head):
            inv = pl.reciprocal(l_sc[h], approx=approx_recip)       # EUP slot
            o_ref[h] = (acc_sc[h] * inv).astype(o_ref.dtype)


def pallas_mha(q, k, v, *, n_head, head_dim, is_causal, bands=(0, 0, 0),
               compute_dtype=jnp.bfloat16, exp_dtype=None, out_dtype=None,
               tq=None, tkv=None, vmem_limit=None, approx_recip=True):
    """Flash attention.  q/k/v are (bs, seqlen, n_bands*dim) head-minor arrays;
    `bands` gives each operand's last-dim *block* index (dim-wide bands), so
    the fused (bs, seqlen, 3*dim) QKV tensor can be passed three times without
    any XLA slicing.  Returns the torch (bs, n_head, seqlen, head_dim) layout.
    """
    vmem_default, tq_target, exp_default = _gen_defaults()
    vmem_limit = vmem_default if vmem_limit is None else vmem_limit
    exp_dtype = exp_default if exp_dtype is None else exp_dtype
    out_dtype = compute_dtype if out_dtype is None else out_dtype

    bs, seqlen = q.shape[0], q.shape[1]
    dim = n_head * head_dim

    tq_t = tq if tq is not None else tq_target
    tkv_t = tkv if tkv is not None else 256
    in_it = jnp.dtype(q.dtype).itemsize
    out_it = jnp.dtype(out_dtype).itemsize

    def _vmem_need(a, b):
        return (2 * a * dim * in_it + 4 * b * dim * in_it     # q + k,v dbl-buf
                + 2 * n_head * a * head_dim * out_it          # out dbl-buf
                + n_head * a * (head_dim + 2) * 4)            # f32 scratch

    while _vmem_need(tq_t, tkv_t) > (vmem_limit * 3) // 4 and max(tq_t, tkv_t) > 128:
        if tkv_t >= tq_t:
            tkv_t //= 2
        else:
            tq_t //= 2

    tq = _pick_tile(seqlen, tq_t, 128)    # 128-aligned tiles keep every
    tkv = _pick_tile(seqlen, tkv_t, 128)  # vmatmul / vst full-width

    qb, kb, vb = bands

    def q_map(b, qi, ki):
        return (b, qi, qb)

    def kv_map_for(band):
        def kv_map(b, qi, ki):
            if is_causal:
                # Past this q-tile's causal window keep returning the last
                # needed KV block -> the skipped tile's HBM fetch is elided
                # (block index unchanged between steps).
                ki = jnp.minimum(ki, (qi * tq + (tq - 1)) // tkv)
            return (b, ki, band)
        return kv_map

    causal_div = 2 if is_causal else 1
    cost = pl.CostEstimate(
        flops=4 * bs * n_head * seqlen * seqlen * head_dim // causal_div,
        transcendentals=bs * n_head * seqlen * seqlen // causal_div,
        bytes_accessed=(2 * bs * seqlen * dim * in_it
                        + 2 * bs * seqlen * dim * in_it
                        * max(1, seqlen // tq) // causal_div
                        + bs * seqlen * dim * out_it))

    kernel = partial(_mha_kernel, n_head=n_head, head_dim=head_dim,
                     tq=tq, tkv=tkv, is_causal=is_causal,
                     compute_dtype=compute_dtype, exp_dtype=exp_dtype,
                     approx_recip=approx_recip)

    # TODO(synk): on v7x (2 TCs) a contiguous q-tile split is load-imbalanced
    # under causal masking; interleave qi across cores via the index maps.
    return pl.pallas_call(
        kernel,
        out_shape=jax.ShapeDtypeStruct((bs, n_head, seqlen, head_dim), out_dtype),
        grid=(bs, seqlen // tq, seqlen // tkv),
        in_specs=[pl.BlockSpec((None, tq, dim), q_map),
                  pl.BlockSpec((None, tkv, dim), kv_map_for(kb)),
                  pl.BlockSpec((None, tkv, dim), kv_map_for(vb))],
        out_specs=pl.BlockSpec((None, n_head, tq, head_dim),
                               lambda b, qi, ki: (b, 0, qi, 0)),
        scratch_shapes=[pltpu.VMEM((n_head, tq, 1), jnp.float32),
                        pltpu.VMEM((n_head, tq, 1), jnp.float32),
                        pltpu.VMEM((n_head, tq, head_dim), jnp.float32)],
        compiler_params=pltpu.CompilerParams(
            dimension_semantics=("parallel", "parallel", "arbitrary"),
            vmem_limit_bytes=vmem_limit),
        cost_estimate=cost,
    )(q, k, v)


# ------------------------------ module forward ------------------------------ #

def attention_forward(x, w_qkv, w_out, *, n_head, is_causal=True,
                      scale=None, dropout=0.0, compute_dtype=jnp.bfloat16):
    """Forward pass matching Attention.forward.

    x:     (bs, seqlen, dim) f32
    w_qkv: (dim, 3*dim) f32  (torch to_qkv Linear weight transposed; output
           columns ordered (qkv, head, head_dim) exactly as the Rearrange).
    w_out: (dim, dim)  f32   (torch out Linear weight transposed).
    """
    bs, seqlen, dim = x.shape
    assert dim % n_head == 0
    head_dim = dim // n_head
    scale = scale if scale is not None else head_dim ** (-0.5)
    vmem_limit, _, _ = _gen_defaults()

    # Trace-time weight prep (O(dim^2), once): softmax scale folded into the q
    # columns of the fused QKV weight; weights stored bf16 (half the DMA bytes).
    col_scale = jnp.concatenate([jnp.full((dim,), scale, jnp.float32),
                                 jnp.ones((2 * dim,), jnp.float32)])
    w_qkv_b = (w_qkv * col_scale[None, :]).astype(compute_dtype)
    w_o_b = w_out.astype(compute_dtype)

    # self.norm (LayerNorm) is never used in the reference forward -> omitted.

    x2d = x.reshape(bs * seqlen, dim)
    # One fused QKV projection (one launch instead of three).
    qkv2d = pallas_matmul(x2d, w_qkv_b, out_dtype=compute_dtype,
                          compute_dtype=compute_dtype, vmem_limit=vmem_limit)

    if dim % 128 == 0:
        # Lane-aligned dim-wide bands: hand the fused tensor straight to the
        # attention kernel; its BlockSpecs select the q/k/v column band, so no
        # activation slice/copy is ever materialized in XLA.
        qkv = qkv2d.reshape(bs, seqlen, 3 * dim)
        attn = pallas_mha(qkv, qkv, qkv, n_head=n_head, head_dim=head_dim,
                          is_causal=is_causal, bands=(0, 1, 2),
                          compute_dtype=compute_dtype, vmem_limit=vmem_limit)
    else:
        # dim-wide blocks of a 3*dim-wide array would violate the (8,128)
        # block constraint -> split in XLA (tiny copies at such small dims).
        q = qkv2d[:, 0 * dim:1 * dim].reshape(bs, seqlen, dim)
        k = qkv2d[:, 1 * dim:2 * dim].reshape(bs, seqlen, dim)
        v = qkv2d[:, 2 * dim:3 * dim].reshape(bs, seqlen, dim)
        attn = pallas_mha(q, k, v, n_head=n_head, head_dim=head_dim,
                          is_causal=is_causal, bands=(0, 0, 0),
                          compute_dtype=compute_dtype, vmem_limit=vmem_limit)

    # dropout == 0.0 -> identity.
    # TODO(synk): dropout p > 0 not implemented (pltpu.prng_* in-kernel).

    # Faithful replica of the reference `out.view(bs, seqlen, h*d)` applied to
    # the contiguous (b, h, n, d) tensor: a raw row-major reshape (it mixes
    # head and sequence dims, exactly like torch's .view here).  Free.
    out2d = attn.reshape(bs * seqlen, n_head * head_dim)

    y = pallas_matmul(out2d, w_o_b, out_dtype=jnp.float32,
                      compute_dtype=compute_dtype, vmem_limit=vmem_limit)
    return y.reshape(bs, seqlen, dim)


# --------------------------------- reference -------------------------------- #

def _reference_forward(x, w_qkv, w_out, *, n_head, is_causal, scale):
    """Pure-jnp replica of the PyTorch module (loose sanity check only)."""
    bs, seqlen, dim = x.shape
    hd = dim // n_head
    scale = scale if scale is not None else hd ** (-0.5)
    qkv = (x.reshape(bs * seqlen, dim) @ w_qkv).reshape(bs, seqlen, 3, n_head, hd)
    qkv = jnp.transpose(qkv, (2, 0, 3, 1, 4))          # (3, b, h, n, d)
    q, k, v = qkv[0], qkv[1], qkv[2]
    s = jnp.einsum('bhqd,bhkd->bhqk', q, k) * scale
    if is_causal:
        mask = jnp.tril(jnp.ones((seqlen, seqlen), dtype=bool))
        s = jnp.where(mask, s, -jnp.inf)
    p = jax.nn.softmax(s, axis=-1)
    o = jnp.einsum('bhqk,bhkd->bhqd', p, v)            # (b, h, n, d)
    o = o.reshape(bs, seqlen, n_head * hd)             # the reference's .view()
    return (o.reshape(bs * seqlen, dim) @ w_out).reshape(bs, seqlen, dim)


if __name__ == "__main__":
    bs, seqlen, dim, n_head = 2, 8, 32, 2      # head_dim = 16
    key = jax.random.PRNGKey(0)
    kx, kq, ko = jax.random.split(key, 3)

    x = jax.random.normal(kx, (bs, seqlen, dim), dtype=jnp.float32)
    w_qkv = jax.random.normal(kq, (dim, 3 * dim), dtype=jnp.float32) * (dim ** -0.5)
    w_out = jax.random.normal(ko, (dim, dim), dtype=jnp.float32) * (dim ** -0.5)

    y = attention_forward(x, w_qkv, w_out, n_head=n_head, is_causal=True,
                          dropout=0.0, scale=None)
    y = jax.block_until_ready(y)
    assert y.shape == (bs, seqlen, dim)

    # Loose sanity check vs a pure-jnp reference (bf16 MXU operands => ~1e-2
    # level differences expected; a layout/semantics bug would be O(1)).
    y_ref = _reference_forward(x, w_qkv, w_out, n_head=n_head, is_causal=True,
                               scale=None)
    assert bool(jnp.all(jnp.isfinite(y)))
    err = float(jnp.max(jnp.abs(y - y_ref)))
    assert err < 0.25, f"max abs err {err}"
    print("KERNEL_OK")
</pallas_src>

<mosaic_0001>
module attributes {stable_mosaic.version = 11 : i64} {
  func.func @_matmul_kernel(%arg0: i32, %arg1: i32, %arg2: i32, %arg3: memref<16x32xf32, #tpu.memory_space<vmem>>, %arg4: memref<32x96xbf16, #tpu.memory_space<vmem>>, %arg5: memref<16x96xbf16, #tpu.memory_space<vmem>>, %arg6: memref<16x96xf32, #tpu.memory_space<vmem>>) attributes {dimension_semantics = [#tpu.dimension_semantics<parallel>, #tpu.dimension_semantics<parallel>, #tpu.dimension_semantics<arbitrary>], iteration_bounds = array<i64: 1, 1, 1>, scalar_prefetch = 0 : i64, scratch_operands = 1 : i64, tpu.core_type = #tpu.core_type<tc>, window_params = [{transform_indices = @transform_0, window_bounds = array<i64: 16, 32>}, {transform_indices = @transform_1, window_bounds = array<i64: 32, 96>}, {transform_indices = @transform_2, window_bounds = array<i64: 16, 96>}]} {
    %c0_i32 = arith.constant 0 : i32
    %0 = arith.cmpi eq, %arg2, %c0_i32 : i32
    %1 = arith.extui %0 : i1 to i32
    %c0_i32_0 = arith.constant 0 : i32
    %2 = arith.cmpi ne, %1, %c0_i32_0 : i32
    scf.if %2 {
      %cst_10 = arith.constant 0.000000e+00 : f32
      %13 = vector.broadcast %cst_10 : f32 to vector<16x96xf32>
      %c0_11 = arith.constant 0 : index
      %c0_12 = arith.constant 0 : index
      %14 = vector.load %arg6[%c0_11, %c0_12] : memref<16x96xf32, #tpu.memory_space<vmem>>, vector<16x96xf32>
      tpu.vector_store %arg6[%c0_11, %c0_12], %13 {strides = array<i32>} : memref<16x96xf32, #tpu.memory_space<vmem>>, vector<16x96xf32>,
    } else {
    }
    %c0 = arith.constant 0 : index
    %c0_1 = arith.constant 0 : index
    %3 = vector.load %arg6[%c0, %c0_1] : memref<16x96xf32, #tpu.memory_space<vmem>>, vector<16x96xf32>
    %c0_2 = arith.constant 0 : index
    %c0_3 = arith.constant 0 : index
    %4 = vector.load %arg3[%c0_2, %c0_3] : memref<16x32xf32, #tpu.memory_space<vmem>>, vector<16x32xf32>
    %5 = arith.truncf %4 : vector<16x32xf32> to vector<16x32xbf16>
    %c0_4 = arith.constant 0 : index
    %c0_5 = arith.constant 0 : index
    %6 = vector.load %arg4[%c0_4, %c0_5] : memref<32x96xbf16, #tpu.memory_space<vmem>>, vector<32x96xbf16>
    %cst = arith.constant dense<0.000000e+00> : vector<16x96xf32>
    %7 = tpu.matmul %5, %6, %cst {dimension_numbers = #tpu.dot_dimension_numbers<[1], [0], [0], [1], [0, 0, 1, 1], [], []>} : vector<16x32xbf16>, vector<32x96xbf16>, vector<16x96xf32> -> vector<16x96xf32>
    %8 = arith.addf %3, %7 : vector<16x96xf32>
    %c0_6 = arith.constant 0 : index
    %c0_7 = arith.constant 0 : index
    %9 = vector.load %arg6[%c0_6, %c0_7] : memref<16x96xf32, #tpu.memory_space<vmem>>, vector<16x96xf32>
    tpu.vector_store %arg6[%c0_6, %c0_7], %8 {strides = array<i32>} : memref<16x96xf32, #tpu.memory_space<vmem>>, vector<16x96xf32>,
    %c0_i32_8 = arith.constant 0 : i32
    %10 = arith.cmpi eq, %arg2, %c0_i32_8 : i32
    %11 = arith.extui %10 : i1 to i32
    %c0_i32_9 = arith.constant 0 : i32
    %12 = arith.cmpi ne, %11, %c0_i32_9 : i32
    scf.if %12 {
      %c0_10 = arith.constant 0 : index
      %c0_11 = arith.constant 0 : index
      %13 = vector.load %arg6[%c0_10, %c0_11] : memref<16x96xf32, #tpu.memory_space<vmem>>, vector<16x96xf32>
      %14 = arith.truncf %13 : vector<16x96xf32> to vector<16x96xbf16>
      %c0_12 = arith.constant 0 : index
      %c0_13 = arith.constant 0 : index
      %15 = vector.load %arg5[%c0_12, %c0_13] : memref<16x96xbf16, #tpu.memory_space<vmem>>, vector<16x96xbf16>
      tpu.vector_store %arg5[%c0_12, %c0_13], %14 {strides = array<i32>} : memref<16x96xbf16, #tpu.memory_space<vmem>>, vector<16x96xbf16>,
    } else {
    }
    return
  }
  func.func @transform_0(%arg0: i32, %arg1: i32, %arg2: i32) -> (i32, i32) {
    %c0_i32 = arith.constant 0 : i32
    return %arg0, %arg2 : i32, i32
  }
  func.func @transform_1(%arg0: i32, %arg1: i32, %arg2: i32) -> (i32, i32) {
    %c0_i32 = arith.constant 0 : i32
    return %arg2, %arg1 : i32, i32
  }
  func.func @transform_2(%arg0: i32, %arg1: i32, %arg2: i32) -> (i32, i32) {
    %c0_i32 = arith.constant 0 : i32
    return %arg0, %arg1 : i32, i32
  }
}

</mosaic_0001>

<llo_original>
// kernel: tpu_custom_call.1
$region0: #{tpu_custom_call.1}
  #allocation0 [shape = 'u32[]', space=smem, size = 0x4, offset = 0x4, fixed_abs, tag = 'smem constant byte address 0x4 - core index']
  #allocation1 [shape = 'u32[144,128]{1,0:T(1,128)}', space=vmem, size = 0x12000, scoped, tag = 'internal scratch']
  #allocation2 [shape = 'f32[16,96]{1,0:T(8,128)}', space=vmem, size = 0x2000, scoped, tag = 'scratch operand']
  %s0 = inlined_call_operand.hbm [shape: f32[16,32], index: 0, kind: input, shape index: {}]
  %s1 = inlined_call_operand.hbm [shape: bf16[32,96], index: 1, kind: input, shape index: {}]
  %s2 = inlined_call_operand.hbm [shape: bf16[16,96], index: 2, kind: output, shape index: {}]
  %s3 = sld [smem:[#allocation0]]
  $region34: #{tpu_custom_call.1} parent=0
    _
  %s5 = ssub.s32 1, %s3
  %s6 = scalar_select 0, %s5, %s3
  $region1: #{tpu_custom_call.1} parent=0
    #allocation3 [shape = 'u8[8192]{0}', space=vmem, size = 0x2000, scoped, tag = 'input window, operand 0, single buffered']
    #allocation4 [shape = 's32[1]{0}', space=sflag, size = 0x4, scoped, tag = 'scoped memory for tpu_custom_call.1']
    #allocation5 [shape = 's32[1]{0}', space=sflag, size = 0x4, scoped, tag = 'scoped memory for tpu_custom_call.1']
    #allocation6 [shape = 'u8[8192]{0}', space=vmem, size = 0x2000, scoped, tag = 'input window, operand 1, single buffered']
    #allocation7 [shape = 's32[1]{0}', space=sflag, size = 0x4, scoped, tag = 'scoped memory for tpu_custom_call.1']
    #allocation8 [shape = 'u8[4096]{0}', space=vmem, size = 0x1000, scoped, tag = 'output window, operand 0, single buffered']
    %7 = vsyncpa [#allocation4], 0
    %8 = vsyncpa [#allocation7], 0
    %9 = vsyncpa [#allocation5], 0
    // Predicated region
    $region2: #{tpu_custom_call.1} parent=1 // pred_check
      _
    $region3: #{tpu_custom_call.1} parent=1 // pred_check_branch
      %11 = sbr.rel (0) target = $region5
    $region4: #{tpu_custom_call.1} parent=1 // pred_region
      %s13 = ssub.s32 256, 256
      %14 = vsyncadd [#allocation4], %s13
      %s15 = sshll.u32 [#allocation3], 4
      %s16 = int_to_ptr.vmem [resolvable:$true] %s15
      %21 = dma.hbm_to_vmem [thread:$0]  %s0, 256, %s16, [#allocation4], 128, 128, 8
    $region5: #{tpu_custom_call.1} parent=1 // pred_fallthru
      _
    // Predicated region
    $region6: #{tpu_custom_call.1} parent=1 // pred_check
      _
    $region7: #{tpu_custom_call.1} parent=1 // pred_check_branch
      %23 = sbr.rel (0) target = $region9
    $region8: #{tpu_custom_call.1} parent=1 // pred_region
      %s25 = ssub.s32 256, 256
      %26 = vsyncadd [#allocation7], %s25
      %s27 = sshll.u32 [#allocation6], 4
      %s28 = int_to_ptr.vmem [resolvable:$true] %s27
      %33 = dma.hbm_to_vmem [thread:$0]  %s1, 256, %s28, [#allocation7], 64, 64, 4
    $region9: #{tpu_custom_call.1} parent=1 // pred_fallthru
      _
    // Predicated region
    $region10: #{tpu_custom_call.1} parent=1 // pred_check
      _
    $region11: #{tpu_custom_call.1} parent=1 // pred_check_branch
      %35 = sbr.rel (0) target = $region13
    $region12: #{tpu_custom_call.1} parent=1 // pred_region
      %36 = dma.done [#allocation4], 256
    $region13: #{tpu_custom_call.1} parent=1 // pred_fallthru
      _
    // Predicated region
    $region14: #{tpu_custom_call.1} parent=1 // pred_check
      _
    $region15: #{tpu_custom_call.1} parent=1 // pred_check_branch
      %38 = sbr.rel (0) target = $region17
    $region16: #{tpu_custom_call.1} parent=1 // pred_region
      %39 = dma.done [#allocation7], 256
    $region17: #{tpu_custom_call.1} parent=1 // pred_fallthru
      _
    %p41 = scmp.eq.s32.totalorder 0, 0
    // Predicated region
    $region18: #{tpu_custom_call.1} parent=1 // pred_check
      %p42 = pneg %p41
    $region19: #{tpu_custom_call.1} parent=1 // pred_check_branch
      %44 = sbr.rel (%p42) target = $region21
    $region20: #{tpu_custom_call.1} parent=1 // pred_region
      %vm45 = vcmask 785408
      %46 = vst.msk [vmem:[#allocation2] sm:$0xff] %vm45, 0.0
      %47 = vst.msk [vmem:[#allocation2 + $0x8] sm:$0xff] %vm45, 0.0
    $region21: #{tpu_custom_call.1} parent=1 // pred_fallthru
      _
    %v48 = vld [vmem:[#allocation2] sm:$0xff]
    %v49 = vld [vmem:[#allocation2 + $0x8] sm:$0xff]
    %v50 = vld [vmem:[#allocation3] sm:$0xff]
    %v51 = vld [vmem:[#allocation3 + $0x8] sm:$0xff]
    %v52 = vpack.c.bf16 %v51, %v50
    %v53 = vld [vmem:[#allocation6] sm:$0xf]
    %v54 = vld [vmem:[#allocation6 + $0x4] sm:$0xf]
    %v55 = vld [vmem:[#allocation6 + $0x8] sm:$0xf]
    %v56 = vld [vmem:[#allocation6 + $0xc] sm:$0xf]
    %v61 = vunpack.c.l.b16 %v53
    %v62 = vunpack.c.l.b16 %v54
    %v63 = vunpack.c.l.b16 %v55
    %v64 = vunpack.c.l.b16 %v56
    %v65 = vpack.c.b16 %v62, %v61
    %v66 = vpack.c.b16 %v64, %v63
    %vm69 = vcmask 261120
    %v71 = vsel %vm69, %v52, 0
    %73 = vmatprep.subr.bf16.mxu0 0
    %74 = vmatpush1.bf16.msra.mxu0 %v65
    %75 = vmatprep.subr.bf16.mxu0 0
    %76 = vmatpush1.bf16.msra.mxu0 %v66
    %77 = vmatprep.subr.bf16.mxu0 0
    %78 = vmatpush1.bf16.msra.mxu0 0
    %79 = vmatprep.subr.bf16.mxu0 0
    %80 = vmatpush1.bf16.msra.mxu0 0
    %81 = vmatprep.subr.bf16.mxu0 0
    %82 = vmatpush1.bf16.msra.mxu0 0
    %83 = vmatprep.subr.bf16.mxu0 0
    %84 = vmatpush1.bf16.msra.mxu0 0
    %85 = vmatprep.subr.bf16.mxu0 0
    %86 = vmatpush1.bf16.msra.mxu0 0
    %87 = vmatprep.subr.bf16.mxu0 0
    %88 = vmatpush1.bf16.msra.mxu0 0
    %89 = vmatprep.subr.bf16.mxu0 0
    %90 = vmatpush1.bf16.msra.mxu0 0
    %91 = vmatprep.subr.bf16.mxu0 0
    %92 = vmatpush1.bf16.msra.mxu0 0
    %93 = vmatprep.subr.bf16.mxu0 0
    %94 = vmatpush1.bf16.msra.mxu0 0
    %95 = vmatprep.subr.bf16.mxu0 0
    %96 = vmatpush1.bf16.msra.mxu0 0
    %97 = vmatprep.subr.bf16.mxu0 0
    %98 = vmatpush1.bf16.msra.mxu0 0
    %99 = vmatprep.subr.bf16.mxu0 0
    %100 = vmatpush1.bf16.msra.mxu0 0
    %101 = vmatprep.subr.bf16.mxu0 0
    %102 = vmatpush1.bf16.msra.mxu0 0
    %103 = vmatprep.subr.bf16.mxu0 0
    %104 = vmatpush1.bf16.msra.mxu0 0
    %105 = vmatprep.mubr.bf16.mxu0 0
    %106 = vmatmul.mubr.bf16.gmra.mrb[0].mxu0 %v71
    %v107 = vpop.f32.mrb[0].mxu0
    %v108 = vadd.f32 0.0, %v107
    %v109 = vpop.f32.mrb[0].mxu0
    %v110 = vpop.f32.mrb[0].mxu0
    %v111 = vadd.f32 0.0, %v110
    %v112 = vpop.f32.mrb[0].mxu0
    %113 = vdwg.mxu0
    %v114 = vadd.f32 %v48, %v108
    %v115 = vadd.f32 %v49, %v111
    %vm116 = vcmask 785408
    %117 = vst.msk [vmem:[#allocation2] sm:$0xff] %vm116, %v114
    %118 = vst.msk [vmem:[#allocation2 + $0x8] sm:$0xff] %vm116, %v115
    // Predicated region
    $region22: #{tpu_custom_call.1} parent=1 // pred_check
      %p119 = pneg %p41
    $region23: #{tpu_custom_call.1} parent=1 // pred_check_branch
      %121 = sbr.rel (%p119) target = $region25
    $region24: #{tpu_custom_call.1} parent=1 // pred_region
      %v122 = vld [vmem:[#allocation2] sm:$0xff]
      %v123 = vld [vmem:[#allocation2 + $0x8] sm:$0xff]
      %v124 = vpack.c.bf16 %v123, %v122
      %v126 = vunpack.c.l.b16 %v124
      %v127 = vunpack.c.h.b16 %v124
      %v128 = vpack.c.b16 %v126, %v126
      %v129 = vpack.c.b16 %v127, %v127
      %vm132 = vcmask 781312
      %133 = vst.msk [vmem:[#allocation8] sm:$0xf] %vm132, %v128
      %134 = vst.msk [vmem:[#allocation8 + $0x4] sm:$0xf] %vm132, %v129
    $region25: #{tpu_custom_call.1} parent=1 // pred_fallthru
      _
    // Predicated region
    $region26: #{tpu_custom_call.1} parent=1 // pred_check
      _
    $region27: #{tpu_custom_call.1} parent=1 // pred_check_branch
      %136 = sbr.rel (0) target = $region29
    $region28: #{tpu_custom_call.1} parent=1 // pred_region
      %s138 = ssub.s32 128, 128
      %139 = vsyncadd [#allocation5], %s138
      %s140 = sshll.u32 [#allocation8], 4
      %s141 = int_to_ptr.vmem [resolvable:$true] %s140
      %146 = dma.vmem_to_hbm [thread:$0]  %s141, 128, %s2, [#allocation5], 64, 64, 4
    $region29: #{tpu_custom_call.1} parent=1 // pred_fallthru
      _
    // Predicated region
    $region30: #{tpu_custom_call.1} parent=1 // pred_check
      _
    $region31: #{tpu_custom_call.1} parent=1 // pred_check_branch
      %148 = sbr.rel (0) target = $region33
    $region32: #{tpu_custom_call.1} parent=1 // pred_region
      %149 = dma.done [#allocation5], 128
    $region33: #{tpu_custom_call.1} parent=1 // pred_fallthru
      _
    %150 = vsyncpa [#allocation4], 1
    %151 = vsyncpa [#allocation7], 1
    %152 = vsyncpa [#allocation5], 1

</llo_original>
